<compile_context>
chip_gen: v7x
topology: tpu7x:2x2x1
jax: 0.10.0
libtpu: 0.0.40
codegen_flags: <defaults>
</compile_context>

<pallas_src>
import jax
import jax.numpy as jnp
from jax import lax
from jax.experimental import pallas as pl
from jax.experimental.pallas import tpu as pltpu


def _ce_rows_kernel(scale_ref, a_ref, b_ref, loss_ref, m_scr, l_scr, d_scr):
    """Row-wise softmax cross-entropy of  scale * A @ B.T  with labels = arange(N).

    Grid: (row_tiles, col_tiles); column axis is the sequential reduction axis.
    Writes per-row (logsumexp - correct_logit) for each [bm] row tile.
    """
    i = pl.program_id(0)          # row tile   (parallel)
    j = pl.program_id(1)          # col tile   (arbitrary / reduction)
    nj = pl.num_programs(1)
    scale = scale_ref[0]

    @pl.when(j == 0)
    def _init():
        m_scr[...] = jnp.full_like(m_scr, -jnp.inf)
        l_scr[...] = jnp.zeros_like(l_scr)

    a = a_ref[...]                # [bm, D], native dtype (bf16/f32) -> MXU
    b = b_ref[...]                # [bn, D]

    # scale * A @ B.T without transposing B: contract D (dim 1) of both operands.
    s = scale * lax.dot_general(
        a, b, (((1,), (1,)), ((), ())),
        preferred_element_type=jnp.float32)          # [bm, bn] f32

    # Online softmax (logsumexp) update.
    m_prev = m_scr[...]
    m_new = jnp.maximum(m_prev, jnp.max(s, axis=1, keepdims=True))
    p = jnp.exp(s - m_new)
    alpha = jnp.exp(m_prev - m_new)
    l_scr[...] = alpha * l_scr[...] + jnp.sum(p, axis=1, keepdims=True)
    m_scr[...] = m_new

    # Correct-class logit: rows of this A tile pair with the SAME rows of B,
    # which is exactly the B tile at j == i (bm == bn).  Computed in f32 from
    # the [bm, D] feature tiles -- no [N, N] iota mask, no logits gather.
    @pl.when(j == i)
    def _diag():
        d_scr[...] = scale * jnp.sum(
            a.astype(jnp.float32) * b.astype(jnp.float32),
            axis=1, keepdims=True)

    @pl.when(j == nj - 1)
    def _finalize():
        loss_ref[...] = (m_scr[...] + jnp.log(l_scr[...])) - d_scr[...]


def _ce_rows(a, b, scale_arr, block_rows):
    """Per-row CE losses of  scale * a @ b.T  with labels = arange(N). Returns [N, 1] f32."""
    n, d = a.shape
    bm = block_rows
    n_tiles = n // bm
    grid_spec = pltpu.PrefetchScalarGridSpec(
        num_scalar_prefetch=1,                      # logits scale -> SMEM
        grid=(n_tiles, n_tiles),
        in_specs=[
            pl.BlockSpec((bm, d), lambda i, j, s: (i, 0)),   # A row tile (held over j)
            pl.BlockSpec((bm, d), lambda i, j, s: (j, 0)),   # B col tile (streamed)
        ],
        out_specs=pl.BlockSpec((bm, 1), lambda i, j, s: (i, 0)),
        scratch_shapes=[
            pltpu.VMEM((bm, 1), jnp.float32),   # running max
            pltpu.VMEM((bm, 1), jnp.float32),   # running sum-exp
            pltpu.VMEM((bm, 1), jnp.float32),   # diagonal (correct-class) logits
        ],
    )
    return pl.pallas_call(
        _ce_rows_kernel,
        out_shape=jax.ShapeDtypeStruct((n, 1), jnp.float32),
        grid_spec=grid_spec,
        compiler_params=pltpu.CompilerParams(
            dimension_semantics=("parallel", "arbitrary")),
    )(scale_arr, a, b)


def _pick_block(n):
    # Prefer MXU-friendly 256-multiples (v6e/v7x 256x256 MXU), then 128 (v5e), then smaller.
    for blk in (512, 256, 128, 64, 32, 16, 8):
        if n % blk == 0:
            return blk
    return n   # non-multiple-of-8 batch: single full-size tile (block == array dim)


def clip_loss(image_features, text_features, logits_scale, block_rows=None):
    """Pallas implementation of ClipLoss.forward (world_size=1 path)."""
    assert image_features.shape == text_features.shape
    n, _ = image_features.shape
    if block_rows is None:
        block_rows = _pick_block(n)
    assert n % block_rows == 0, "batch must be divisible by block_rows"

    scale_arr = jnp.reshape(jnp.asarray(logits_scale, dtype=jnp.float32), (1,))

    # image -> text CE: rows of  scale * img @ txt.T
    per_row_img = _ce_rows(image_features, text_features, scale_arr, block_rows)
    # text -> image CE: rows of  scale * txt @ img.T  (== columns of the matrix above)
    per_row_txt = _ce_rows(text_features, image_features, scale_arr, block_rows)

    inv_n = jnp.float32(1.0 / n)
    return 0.5 * inv_n * (jnp.sum(per_row_img) + jnp.sum(per_row_txt))


def clip_loss_ref(image_features, text_features, logits_scale):
    """Pure-JAX reference for correctness checking (matches the PyTorch module)."""
    img = image_features.astype(jnp.float32)
    txt = text_features.astype(jnp.float32)
    logits = logits_scale * jnp.matmul(img, txt.T, precision=lax.Precision.HIGHEST)
    n = logits.shape[0]
    idx = jnp.arange(n)

    def ce(l):
        lse = jax.nn.logsumexp(l, axis=1)
        return jnp.mean(lse - l[idx, idx])

    return 0.5 * (ce(logits) + ce(logits.T))


if __name__ == "__main__":
    # Small deterministic inputs: batch N=32, feature dim D=64, bf16 features
    # (the native MXU dtype).  block_rows=16 forces a 2x2 grid so the online
    # softmax accumulation and the i==j diagonal path are both exercised.
    key = jax.random.PRNGKey(0)
    k_img, k_txt = jax.random.split(key)
    N, D = 32, 64

    img = jax.random.normal(k_img, (N, D), dtype=jnp.float32)
    txt = jax.random.normal(k_txt, (N, D), dtype=jnp.float32)
    # CLIP normalizes features before the loss; do the same for a realistic range.
    img = (img / jnp.linalg.norm(img, axis=-1, keepdims=True)).astype(jnp.bfloat16)
    txt = (txt / jnp.linalg.norm(txt, axis=-1, keepdims=True)).astype(jnp.bfloat16)

    # Deterministic "learned" temperature (CLIP default init: 1/0.07 ~= 14.29).
    logits_scale = jnp.float32(1.0 / 0.07)

    loss = clip_loss(img, txt, logits_scale, block_rows=16)
    loss = jax.block_until_ready(loss)

    ref = clip_loss_ref(img, txt, logits_scale)
    assert jnp.allclose(loss, ref, rtol=1e-3, atol=1e-3), (loss, ref)

    print("KERNEL_OK")
</pallas_src>

<mosaic_0001>
module attributes {stable_mosaic.version = 11 : i64} {
  func.func @_ce_rows_kernel(%arg0: i32, %arg1: i32, %arg2: memref<1xf32, #tpu.memory_space<smem>>, %arg3: memref<16x64xbf16, #tpu.memory_space<vmem>>, %arg4: memref<16x64xbf16, #tpu.memory_space<vmem>>, %arg5: memref<16x1xf32, #tpu.memory_space<vmem>>, %arg6: memref<16x1xf32, #tpu.memory_space<vmem>>, %arg7: memref<16x1xf32, #tpu.memory_space<vmem>>, %arg8: memref<16x1xf32, #tpu.memory_space<vmem>>) attributes {dimension_semantics = [#tpu.dimension_semantics<parallel>, #tpu.dimension_semantics<arbitrary>], iteration_bounds = array<i64: 2, 2>, scalar_prefetch = 1 : i64, scratch_operands = 3 : i64, tpu.core_type = #tpu.core_type<tc>, window_params = [{transform_indices = @transform_0, window_bounds = array<i64: 16, 64>}, {transform_indices = @transform_1, window_bounds = array<i64: 16, 64>}, {transform_indices = @transform_2, window_bounds = array<i64: 16, 1>}]} {
    %c0 = arith.constant 0 : index
    %0 = memref.load %arg2[%c0] : memref<1xf32, #tpu.memory_space<smem>>
    %c0_i32 = arith.constant 0 : i32
    %1 = arith.cmpi eq, %arg1, %c0_i32 : i32
    %2 = arith.extui %1 : i1 to i32
    %c0_i32_0 = arith.constant 0 : i32
    %3 = arith.cmpi ne, %2, %c0_i32_0 : i32
    scf.if %3 {
      %cst_17 = arith.constant 0xFF800000 : f32
      %31 = vector.broadcast %cst_17 : f32 to vector<16x1xf32>
      %c0_18 = arith.constant 0 : index
      %c0_19 = arith.constant 0 : index
      %32 = vector.load %arg6[%c0_18, %c0_19] : memref<16x1xf32, #tpu.memory_space<vmem>>, vector<16x1xf32>
      tpu.vector_store %arg6[%c0_18, %c0_19], %31 {strides = array<i32>} : memref<16x1xf32, #tpu.memory_space<vmem>>, vector<16x1xf32>,
      %cst_20 = arith.constant 0.000000e+00 : f32
      %33 = vector.broadcast %cst_20 : f32 to vector<16x1xf32>
      %c0_21 = arith.constant 0 : index
      %c0_22 = arith.constant 0 : index
      %34 = vector.load %arg7[%c0_21, %c0_22] : memref<16x1xf32, #tpu.memory_space<vmem>>, vector<16x1xf32>
      tpu.vector_store %arg7[%c0_21, %c0_22], %33 {strides = array<i32>} : memref<16x1xf32, #tpu.memory_space<vmem>>, vector<16x1xf32>,
    } else {
    }
    %c0_1 = arith.constant 0 : index
    %c0_2 = arith.constant 0 : index
    %4 = vector.load %arg3[%c0_1, %c0_2] : memref<16x64xbf16, #tpu.memory_space<vmem>>, vector<16x64xbf16>
    %c0_3 = arith.constant 0 : index
    %c0_4 = arith.constant 0 : index
    %5 = vector.load %arg4[%c0_3, %c0_4] : memref<16x64xbf16, #tpu.memory_space<vmem>>, vector<16x64xbf16>
    %cst = arith.constant dense<0.000000e+00> : vector<16x16xf32>
    %6 = tpu.matmul %4, %5, %cst {dimension_numbers = #tpu.dot_dimension_numbers<[1], [1], [0], [0], [0, 0, 1, 0], [], []>} : vector<16x64xbf16>, vector<16x64xbf16>, vector<16x16xf32> -> vector<16x16xf32>
    %7 = vector.broadcast %0 : f32 to vector<16x16xf32>
    %8 = arith.mulf %7, %6 : vector<16x16xf32>
    %c0_5 = arith.constant 0 : index
    %c0_6 = arith.constant 0 : index
    %9 = vector.load %arg6[%c0_5, %c0_6] : memref<16x1xf32, #tpu.memory_space<vmem>>, vector<16x1xf32>
    %cst_7 = arith.constant dense<0xFF800000> : vector<16xf32>
    %10 = vector.multi_reduction <maximumf>, %8, %cst_7 [1] : vector<16x16xf32> to vector<16xf32>
    %11 = vector.shape_cast %10 : vector<16xf32> to vector<16x1xf32>
    %12 = arith.maximumf %9, %11 : vector<16x1xf32>
    %13 = vector.broadcast %12 : vector<16x1xf32> to vector<16x16xf32>
    %14 = arith.subf %8, %13 : vector<16x16xf32>
    %15 = math.exp %14 : vector<16x16xf32>
    %16 = arith.subf %9, %12 : vector<16x1xf32>
    %17 = math.exp %16 : vector<16x1xf32>
    %c0_8 = arith.constant 0 : index
    %c0_9 = arith.constant 0 : index
    %18 = vector.load %arg7[%c0_8, %c0_9] : memref<16x1xf32, #tpu.memory_space<vmem>>, vector<16x1xf32>
    %19 = arith.mulf %17, %18 : vector<16x1xf32>
    %cst_10 = arith.constant dense<0.000000e+00> : vector<16xf32>
    %20 = vector.multi_reduction <add>, %15, %cst_10 [1] : vector<16x16xf32> to vector<16xf32>
    %21 = vector.shape_cast %20 : vector<16xf32> to vector<16x1xf32>
    %22 = arith.addf %19, %21 : vector<16x1xf32>
    %c0_11 = arith.constant 0 : index
    %c0_12 = arith.constant 0 : index
    %23 = vector.load %arg7[%c0_11, %c0_12] : memref<16x1xf32, #tpu.memory_space<vmem>>, vector<16x1xf32>
    tpu.vector_store %arg7[%c0_11, %c0_12], %22 {strides = array<i32>} : memref<16x1xf32, #tpu.memory_space<vmem>>, vector<16x1xf32>,
    %c0_13 = arith.constant 0 : index
    %c0_14 = arith.constant 0 : index
    %24 = vector.load %arg6[%c0_13, %c0_14] : memref<16x1xf32, #tpu.memory_space<vmem>>, vector<16x1xf32>
    tpu.vector_store %arg6[%c0_13, %c0_14], %12 {strides = array<i32>} : memref<16x1xf32, #tpu.memory_space<vmem>>, vector<16x1xf32>,
    %25 = arith.cmpi eq, %arg1, %arg0 : i32
    %26 = arith.extui %25 : i1 to i32
    %c0_i32_15 = arith.constant 0 : i32
    %27 = arith.cmpi ne, %26, %c0_i32_15 : i32
    scf.if %27 {
      %31 = arith.extf %4 : vector<16x64xbf16> to vector<16x64xf32>
      %32 = arith.extf %5 : vector<16x64xbf16> to vector<16x64xf32>
      %33 = arith.mulf %31, %32 : vector<16x64xf32>
      %cst_17 = arith.constant dense<0.000000e+00> : vector<16xf32>
      %34 = vector.multi_reduction <add>, %33, %cst_17 [1] : vector<16x64xf32> to vector<16xf32>
      %35 = vector.shape_cast %34 : vector<16xf32> to vector<16x1xf32>
      %36 = vector.broadcast %0 : f32 to vector<16x1xf32>
      %37 = arith.mulf %36, %35 : vector<16x1xf32>
      %c0_18 = arith.constant 0 : index
      %c0_19 = arith.constant 0 : index
      %38 = vector.load %arg8[%c0_18, %c0_19] : memref<16x1xf32, #tpu.memory_space<vmem>>, vector<16x1xf32>
      tpu.vector_store %arg8[%c0_18, %c0_19], %37 {strides = array<i32>} : memref<16x1xf32, #tpu.memory_space<vmem>>, vector<16x1xf32>,
    } else {
    }
    %c1_i32 = arith.constant 1 : i32
    %28 = arith.cmpi eq, %arg1, %c1_i32 : i32
    %29 = arith.extui %28 : i1 to i32
    %c0_i32_16 = arith.constant 0 : i32
    %30 = arith.cmpi ne, %29, %c0_i32_16 : i32
    scf.if %30 {
      %c0_17 = arith.constant 0 : index
      %c0_18 = arith.constant 0 : index
      %31 = vector.load %arg6[%c0_17, %c0_18] : memref<16x1xf32, #tpu.memory_space<vmem>>, vector<16x1xf32>
      %c0_19 = arith.constant 0 : index
      %c0_20 = arith.constant 0 : index
      %32 = vector.load %arg7[%c0_19, %c0_20] : memref<16x1xf32, #tpu.memory_space<vmem>>, vector<16x1xf32>
      %33 = math.log %32 : vector<16x1xf32>
      %34 = arith.addf %31, %33 : vector<16x1xf32>
      %c0_21 = arith.constant 0 : index
      %c0_22 = arith.constant 0 : index
      %35 = vector.load %arg8[%c0_21, %c0_22] : memref<16x1xf32, #tpu.memory_space<vmem>>, vector<16x1xf32>
      %36 = arith.subf %34, %35 : vector<16x1xf32>
      %c0_23 = arith.constant 0 : index
      %c0_24 = arith.constant 0 : index
      %37 = vector.load %arg5[%c0_23, %c0_24] : memref<16x1xf32, #tpu.memory_space<vmem>>, vector<16x1xf32>
      tpu.vector_store %arg5[%c0_23, %c0_24], %36 {strides = array<i32>} : memref<16x1xf32, #tpu.memory_space<vmem>>, vector<16x1xf32>,
    } else {
    }
    return
  }
  func.func @transform_0(%arg0: i32, %arg1: i32, %arg2: memref<1xf32, #tpu.memory_space<smem>>) -> (i32, i32) {
    %c0_i32 = arith.constant 0 : i32
    %c0_i32_0 = arith.constant 0 : i32
    return %arg0, %c0_i32 : i32, i32
  }
  func.func @transform_1(%arg0: i32, %arg1: i32, %arg2: memref<1xf32, #tpu.memory_space<smem>>) -> (i32, i32) {
    %c0_i32 = arith.constant 0 : i32
    %c0_i32_0 = arith.constant 0 : i32
    return %arg1, %c0_i32 : i32, i32
  }
  func.func @transform_2(%arg0: i32, %arg1: i32, %arg2: memref<1xf32, #tpu.memory_space<smem>>) -> (i32, i32) {
    %c0_i32 = arith.constant 0 : i32
    %c0_i32_0 = arith.constant 0 : i32
    return %arg0, %c0_i32 : i32, i32
  }
}

</mosaic_0001>

<llo_original>
// kernel: tpu_custom_call.1
$region0: #{tpu_custom_call.1}
  #allocation0 [shape = 'u32[]', space=smem, size = 0x4, offset = 0x4, fixed_abs, tag = 'smem constant byte address 0x4 - core index']
  #allocation1 [shape = 'u32[144,128]{1,0:T(1,128)}', space=vmem, size = 0x12000, scoped, tag = 'internal scratch']
  #allocation2 [shape = 'f32[16,1]{1,0:T(8,128)}', space=vmem, size = 0x2000, scoped, tag = 'scratch operand']
  #allocation3 [shape = 'f32[16,1]{1,0:T(8,128)}', space=vmem, size = 0x2000, scoped, tag = 'scratch operand']
  #allocation4 [shape = 'f32[16,1]{1,0:T(8,128)}', space=vmem, size = 0x2000, scoped, tag = 'scratch operand']
  #allocation5 [shape = 's32[1]{0}', space=sflag, size = 0x4, scoped, tag = 'scoped memory for tpu_custom_call.1']
  #allocation6 [shape = 'f32[1]{0:T(128)S(6)}', space=smem, size = 0x200, scoped, tag = 'prefetched SMEM operand 0']
  %s0 = inlined_call_operand.<no memory space> [shape: f32[1], index: 0, kind: input, shape index: {}]
  %s1 = inlined_call_operand.hbm [shape: bf16[32,64], index: 1, kind: input, shape index: {}]
  %s2 = inlined_call_operand.hbm [shape: bf16[32,64], index: 2, kind: input, shape index: {}]
  %s3 = inlined_call_operand.vmem [shape: f32[32,1], index: 3, kind: output, shape index: {}]
  %s4 = sld [smem:[#allocation0]]
  $region61: #{tpu_custom_call.1} parent=0
    _
  %s6 = ssub.s32 1, %s4
  %s7 = scalar_select 0, %s6, %s4
  %8 = sst [smem:[#allocation6]] %s0
  $region1: #{tpu_custom_call.1} parent=0
    #allocation7 [shape = 'u8[8192]{0}', space=vmem, size = 0x2000, scoped, tag = 'input window, operand 1']
    #allocation8 [shape = 's32[2]{0}', space=sflag, size = 0x8, scoped, tag = 'scoped memory for tpu_custom_call.1']
    #allocation9 [shape = 'u8[8192]{0}', space=vmem, size = 0x2000, scoped, tag = 'input window, operand 2']
    #allocation10 [shape = 's32[2]{0}', space=sflag, size = 0x8, scoped, tag = 'scoped memory for tpu_custom_call.1']
    %9 = vsyncpa [#allocation8], 0
    %s10 = scalar_lea.sflag [#allocation8], 1
    %11 = vsyncpa %s10, 0
    %12 = vsyncpa [#allocation10], 0
    %s13 = scalar_lea.sflag [#allocation10], 1
    %14 = vsyncpa %s13, 0
    loop: start=0, step=1, limit=6
    $region2: #{tpu_custom_call.1} parent=1 // loop_pre_header
      _
    $region3: #{tpu_custom_call.1} parent=1 // loop_header
      %s16 = sphi 0, %s20
      %p17 = scmp.ge.s32.totalorder %s16, 6
      %s23 = sphi 0, %s35
      %s24 = sphi 0, %s31
      %s25 = sphi 0, %s23
      %s26 = sphi 0, %s24
      %s27 = sphi 0, %s25
      %s28 = sphi 0, %s26
      %s38 = sphi 0, %s40
      %s41 = sphi 0, %s38
      %s42 = sphi 0, %s41
      %s58 = sphi 0, %s42
      %s64 = sphi 0, %s66
      %s67 = sphi 0, %s64
      %s68 = sphi 0, %s67
      %s84 = sphi 0, %s68
      %s90 = sphi 0, %s92
      %s93 = sphi 0, %s90
      %s94 = sphi 0, %s93
      %s110 = sphi 0, %s94
    $region4: #{tpu_custom_call.1} parent=1 // loop_header_branch
      %19 = sbr.rel (%p17) target = $region8
    $region5: #{tpu_custom_call.1} parent=1 // loop_body
      %s21 = ssub.s32 %s16, 1
      %s22 = ssub.s32 %s16, 2
      %s29 = sadd.s32 1, %s24
      %p30 = scmp.ge.s32.totalorder %s29, 2
      %s31 = scalar_select %p30, 0, %s29
      %s32 = sadd.s32 1, %s23
      %s33 = scalar_select %p30, %s32, %s23
      %p34 = scmp.ge.s32.totalorder %s33, 2
      %s35 = scalar_select %p34, 0, %s33
      %s36 = ssub.s32 %s23, %s35
      %p37 = scmp.eq.s32.totalorder %s36, 0
      %s39 = sadd.s32 %s38, 1
      %s40 = scalar_select %p37, %s38, %s39
      %p43 = pneg %p37
      %p44 = scmp.eq.s32.totalorder %s16, 3
      %p45 = por %p43, %p44
      %p46 = scmp.ne.s32.totalorder %s38, %s41
      %p47 = scmp.eq.s32.totalorder %s16, 0
      %p48 = por %p46, %p47
      %p49 = scmp.ne.s32.totalorder %s38, %s41
      %p50 = scmp.eq.s32.totalorder %s21, 3
      %p51 = por %p49, %p50
      %p52 = scmp.ne.s32.totalorder %s41, %s42
      %p53 = scmp.eq.s32.totalorder %s21, 0
      %p54 = por %p52, %p53
      %p55 = scmp.ne.s32.totalorder %s41, %s42
      %p56 = scmp.eq.s32.totalorder %s22, 3
      %p57 = por %p55, %p56
      %p59 = scmp.ne.s32.totalorder %s42, %s58
      %p60 = scmp.eq.s32.totalorder %s22, 0
      %p61 = por %p59, %p60
      %s62 = ssub.s32 %s24, %s31
      %p63 = scmp.eq.s32.totalorder %s62, 0
      %s65 = sadd.s32 %s64, 1
      %s66 = scalar_select %p63, %s64, %s65
      %p69 = pneg %p63
      %p70 = scmp.eq.s32.totalorder %s16, 3
      %p71 = por %p69, %p70
      %p72 = scmp.ne.s32.totalorder %s64, %s67
      %p73 = scmp.eq.s32.totalorder %s16, 0
      %p74 = por %p72, %p73
      %p75 = scmp.ne.s32.totalorder %s64, %s67
      %p76 = scmp.eq.s32.totalorder %s21, 3
      %p77 = por %p75, %p76
      %p78 = scmp.ne.s32.totalorder %s67, %s68
      %p79 = scmp.eq.s32.totalorder %s21, 0
      %p80 = por %p78, %p79
      %p81 = scmp.ne.s32.totalorder %s67, %s68
      %p82 = scmp.eq.s32.totalorder %s22, 3
      %p83 = por %p81, %p82
      %p85 = scmp.ne.s32.totalorder %s68, %s84
      %p86 = scmp.eq.s32.totalorder %s22, 0
      %p87 = por %p85, %p86
      %s88 = ssub.s32 %s23, %s35
      %p89 = scmp.eq.s32.totalorder %s88, 0
      %s91 = sadd.s32 %s90, 1
      %s92 = scalar_select %p89, %s90, %s91
      %p95 = pneg %p89
      %p96 = scmp.eq.s32.totalorder %s16, 3
      %p97 = por %p95, %p96
      %p98 = scmp.ne.s32.totalorder %s90, %s93
      %p99 = scmp.eq.s32.totalorder %s16, 0
      %p100 = por %p98, %p99
      %p101 = scmp.ne.s32.totalorder %s90, %s93
      %p102 = scmp.eq.s32.totalorder %s21, 3
      %p103 = por %p101, %p102
      %p104 = scmp.ne.s32.totalorder %s93, %s94
      %p105 = scmp.eq.s32.totalorder %s21, 0
      %p106 = por %p104, %p105
      %p107 = scmp.ne.s32.totalorder %s93, %s94
      %p108 = scmp.eq.s32.totalorder %s22, 3
      %p109 = por %p107, %p108
      %p111 = scmp.ne.s32.totalorder %s94, %s110
      %p112 = scmp.eq.s32.totalorder %s22, 0
      %p113 = por %p111, %p112
      %p114 = scmp.le.s32.totalorder 1, %s16
      %p115 = scmp.lt.s32.totalorder %s16, 5
      %p116 = pnand %p114, %p115
      %p117 = pneg %p116
      // Predicated region
      $region9: #{tpu_custom_call.1} parent=5 // pred_check
        _
      $region10: #{tpu_custom_call.1} parent=5 // pred_check_branch
        %119 = sbr.rel (%p116) target = $region12
      $region11: #{tpu_custom_call.1} parent=5 // pred_region
        %s120 = ssub.s32 %s16, 1
      $region12: #{tpu_custom_call.1} parent=5 // pred_fallthru
        _
      %p121 = scmp.lt.s32.totalorder %s16, 4
      // Predicated region
      $region13: #{tpu_custom_call.1} parent=5 // pred_check
        %p122 = pneg %p121
      $region14: #{tpu_custom_call.1} parent=5 // pred_check_branch
        %124 = sbr.rel (%p122) target = $region16
      $region15: #{tpu_custom_call.1} parent=5 // pred_region
        // Predicated region
        $region17: #{tpu_custom_call.1} parent=15 // pred_check
          %p125 = pneg %p48
        $region18: #{tpu_custom_call.1} parent=15 // pred_check_branch
          %127 = sbr.rel (%p125) target = $region20
        $region19: #{tpu_custom_call.1} parent=15 // pred_region
          %s128 = sand.u32 %s38, 1
          %s129 = scalar_lea.sflag [#allocation8], %s128
          %s130 = sand.u32 %s38, 1
          %s131 = smul.addr %s130, 8
          %s132 = scalar_lea.vmem [#allocation7], %s131
          %s133 = smul.u32 2, %s23
          %s135 = ssub.s32 128, 128
          %136 = vsyncadd %s129, %s135
          %s137 = smul.addr %s133, 64
          %s138 = scalar_lea.hbm %s1, %s137
          %s139 = sshll.u32 %s132, 4
          %s140 = int_to_ptr.vmem [resolvable:$true] %s139
          %145 = dma.hbm_to_vmem [thread:$0]  %s138, 128, %s140, %s129, 64, 64, 4
        $region20: #{tpu_custom_call.1} parent=15 // pred_fallthru
          _
        // Predicated region
        $region21: #{tpu_custom_call.1} parent=15 // pred_check
          %p146 = pneg %p74
        $region22: #{tpu_custom_call.1} parent=15 // pred_check_branch
          %148 = sbr.rel (%p146) target = $region24
        $region23: #{tpu_custom_call.1} parent=15 // pred_region
          %s149 = sand.u32 %s64, 1
          %s150 = scalar_lea.sflag [#allocation10], %s149
          %s151 = sand.u32 %s64, 1
          %s152 = smul.addr %s151, 8
          %s153 = scalar_lea.vmem [#allocation9], %s152
          %s154 = smul.u32 2, %s24
          %s156 = ssub.s32 128, 128
          %157 = vsyncadd %s150, %s156
          %s158 = smul.addr %s154, 64
          %s159 = scalar_lea.hbm %s2, %s158
          %s160 = sshll.u32 %s153, 4
          %s161 = int_to_ptr.vmem [resolvable:$true] %s160
          %166 = dma.hbm_to_vmem [thread:$0]  %s159, 128, %s161, %s150, 64, 64, 4
        $region24: #{tpu_custom_call.1} parent=15 // pred_fallthru
          _
      $region16: #{tpu_custom_call.1} parent=5 // pred_fallthru
        _
      %p167 = scmp.le.s32.totalorder 1, %s16
      %p168 = scmp.lt.s32.totalorder %s16, 5
      %p169 = pnand %p167, %p168
      %p170 = pneg %p169
      // Predicated region
      $region25: #{tpu_custom_call.1} parent=5 // pred_check
        _
      $region26: #{tpu_custom_call.1} parent=5 // pred_check_branch
        %172 = sbr.rel (%p169) target = $region28
      $region27: #{tpu_custom_call.1} parent=5 // pred_region
        %s173 = ssub.s32 %s16, 1
        %s174 = sand.u32 %s41, 1
        %s175 = scalar_lea.sflag [#allocation8], %s174
        %s176 = sand.u32 %s41, 1
        %s177 = smul.addr %s176, 8
        %s178 = scalar_lea.vmem [#allocation7], %s177
        // Predicated region
        $region29: #{tpu_custom_call.1} parent=27 // pred_check
          %p179 = pneg %p54
        $region30: #{tpu_custom_call.1} parent=27 // pred_check_branch
          %181 = sbr.rel (%p179) target = $region32
        $region31: #{tpu_custom_call.1} parent=27 // pred_region
          %182 = dma.done %s175, 128
        $region32: #{tpu_custom_call.1} parent=27 // pred_fallthru
          _
        %s183 = sand.u32 %s67, 1
        %s184 = scalar_lea.sflag [#allocation10], %s183
        %s185 = sand.u32 %s67, 1
        %s186 = smul.addr %s185, 8
        %s187 = scalar_lea.vmem [#allocation9], %s186
        // Predicated region
        $region33: #{tpu_custom_call.1} parent=27 // pred_check
          %p188 = pneg %p80
        $region34: #{tpu_custom_call.1} parent=27 // pred_check_branch
          %190 = sbr.rel (%p188) target = $region36
        $region35: #{tpu_custom_call.1} parent=27 // pred_region
          %191 = dma.done %s184, 128
        $region36: #{tpu_custom_call.1} parent=27 // pred_fallthru
          _
        %s192 = sand.u32 %s41, 1
        %s193 = scalar_lea.sflag [#allocation8], %s192
        %s194 = sand.u32 %s41, 1
        %s195 = smul.addr %s194, 8
        %s196 = scalar_lea.vmem [#allocation7], %s195
        %p197 = pneg %p54
        %p198 = pneg %p51
        %s199 = sand.u32 %s67, 1
        %s200 = scalar_lea.sflag [#allocation10], %s199
        %s201 = sand.u32 %s67, 1
        %s202 = smul.addr %s201, 8
        %s203 = scalar_lea.vmem [#allocation9], %s202
        %p204 = pneg %p80
        %p205 = pneg %p77
        %p206 = pneg %p106
        %p207 = pneg %p103
        %s208 = smul.u32 2, %s25
        %p209 = scmp.lt.s32.totalorder %s208, 3
        %s210 = scalar_select %p209, %s208, 3
        %s211 = smul.addr %s210, 8
        %s212 = scalar_lea.vmem %s3, %s211
        %s213 = smul.u32 2, %s25
        %s214 = smul.u32 2, %s26
        %s215 = smul.u32 2, %s25
        %p216 = scmp.lt.s32.totalorder %s215, 3
        %s217 = scalar_select %p216, %s215, 3
        %s218 = smul.addr %s217, 8
        %s219 = scalar_lea.vmem %s3, %s218
        %s220 = smul.u32 2, %s25
        %s222 = sld [smem:[#allocation6]]
        %p223 = scmp.eq.s32.totalorder %s26, 0
        // Predicated region
        $region37: #{tpu_custom_call.1} parent=27 // pred_check
          %p224 = pneg %p223
        $region38: #{tpu_custom_call.1} parent=27 // pred_check_branch
          %226 = sbr.rel (%p224) target = $region40
        $region39: #{tpu_custom_call.1} parent=27 // pred_region
          %vm227 = vcmask 7168
          %228 = vst.msk [vmem:[#allocation2] sm:$0xff] %vm227, -inf
          %229 = vst.msk [vmem:[#allocation2 + $0x8] sm:$0xff] %vm227, -inf
          %230 = vst.msk [vmem:[#allocation3] sm:$0xff] %vm227, 0.0
          %231 = vst.msk [vmem:[#allocation3 + $0x8] sm:$0xff] %vm227, 0.0
        $region40: #{tpu_custom_call.1} parent=27 // pred_fallthru
          _
        %v232 = vld [vmem:[%s178] sm:$0xf]
        %v233 = vld [vmem:[%s178 + $0x4] sm:$0xf]
        %v234 = vld [vmem:[%s187] sm:$0xf]
        %v235 = vld [vmem:[%s187 + $0x4] sm:$0xf]
        %v238 = vunpack.c.l.b16 %v232
        %v239 = vunpack.c.l.b16 %v233
        %v240 = vpack.c.b16 %v239, %v238
        %v243 = vunpack.c.l.b16 %v234
        %v244 = vunpack.c.l.b16 %v235
        %v245 = vpack.c.b16 %v244, %v243
        %vm246 = vcmask 523264
        %v248 = vsel %vm246, %v240, 0
        %v251 = vsel %vm246, %v245, 0
        %253 = vmatprep.subr.bf16.mxu0 0
        %254 = vmatpush1.bf16.xpose.msra.mxu0 %v251
        %255 = vmatprep.subr.bf16.mxu0 0
        %256 = vmatpush1.bf16.xpose.msra.mxu0 0
        %257 = vmatprep.subr.bf16.mxu0 0
        %258 = vmatpush1.bf16.xpose.msra.mxu0 0
        %259 = vmatprep.subr.bf16.mxu0 0
        %260 = vmatpush1.bf16.xpose.msra.mxu0 0
        %261 = vmatprep.subr.bf16.mxu0 0
        %262 = vmatpush1.bf16.xpose.msra.mxu0 0
        %263 = vmatprep.subr.bf16.mxu0 0
        %264 = vmatpush1.bf16.xpose.msra.mxu0 0
        %265 = vmatprep.subr.bf16.mxu0 0
        %266 = vmatpush1.bf16.xpose.msra.mxu0 0
        %267 = vmatprep.subr.bf16.mxu0 0
        %268 = vmatpush1.bf16.xpose.msra.mxu0 0
        %269 = vmatprep.subr.bf16.mxu0 0
        %270 = vmatpush1.bf16.xpose.msra.mxu0 0
        %271 = vmatprep.subr.bf16.mxu0 0
        %272 = vmatpush1.bf16.xpose.msra.mxu0 0
        %273 = vmatprep.subr.bf16.mxu0 0
        %274 = vmatpush1.bf16.xpose.msra.mxu0 0
        %275 = vmatprep.subr.bf16.mxu0 0
        %276 = vmatpush1.bf16.xpose.msra.mxu0 0
        %277 = vmatprep.subr.bf16.mxu0 0
        %278 = vmatpush1.bf16.xpose.msra.mxu0 0
        %279 = vmatprep.subr.bf16.mxu0 0
        %280 = vmatpush1.bf16.xpose.msra.mxu0 0
        %281 = vmatprep.subr.bf16.mxu0 0
        %282 = vmatpush1.bf16.xpose.msra.mxu0 0
        %283 = vmatprep.subr.bf16.mxu0 0
        %284 = vmatpush1.bf16.xpose.msra.mxu0 0
        %285 = vmatprep.mubr.bf16.mxu0 0
        %286 = vmatmul.mubr.bf16.gmra.mrb[0].mxu0 %v248
        %v287 = vpop.f32.mrb[0].mxu0
        %v288 = vadd.f32 0.0, %v287
        %v289 = vpop.f32.mrb[0].mxu0
        %v290 = vpop.f32.mrb[0].mxu0
        %v291 = vadd.f32 0.0, %v290
        %v292 = vpop.f32.mrb[0].mxu0
        %293 = vdwg.mxu0
        %v294 = vstv %s222
        %v295 = vmul.f32 %v294, %v288
        %v296 = vmul.f32 %v294, %v291
        %v297 = vld [vmem:[#allocation2] sm:$0xff]
        %v298 = vld [vmem:[#allocation2 + $0x8] sm:$0xff]
        %vm299 = vcmask 130048
        %v300 = vsel %vm299, %v295, -inf
        %301 = vmax.xlane.f32.xlu0 %v300
        %v302 = vpop.xlane.xlu0 %301
        %v303 = vsel %vm299, %v296, -inf
        %304 = vmax.xlane.f32.xlu0 %v303
        %v305 = vpop.xlane.xlu0 %304
        %v306 = vmax.f32 %v297, %v302
        %v307 = vmax.f32 %v298, %v305
        %309 = vset.pattern.permute.xlu0 0
        %310 = vperm.xlu0 %309, %v306
        %v311 = vpop.permute.xlu0 %310
        %314 = vset.pattern.permute.xlu0 0
        %315 = vperm.xlu0 %314, %v307
        %v316 = vpop.permute.xlu0 %315
        %v318 = vsub.f32 %v295, %v311
        %v319 = vsub.f32 %v296, %v316
        %v320 = vmul.f32 %v318, 1.442695
        %v321 = vpow.pop %v320
        %v322 = vmul.f32 %v319, 1.442695
        %v323 = vpow.pop %v322
        %v324 = vsub.f32 %v297, %v306
        %v325 = vsub.f32 %v298, %v307
        %v326 = vmul.f32 %v324, 1.442695
        %v327 = vpow.pop %v326
        %v328 = vmul.f32 %v325, 1.442695
        %v329 = vpow.pop %v328
        %v330 = vld [vmem:[#allocation3] sm:$0xff]
        %v331 = vld [vmem:[#allocation3 + $0x8] sm:$0xff]
        %v332 = vmul.f32 %v327, %v330
        %v333 = vmul.f32 %v329, %v331
        %v334 = vsel %vm299, %v321, 0.0
        %335 = vadd.xlane.f32.xlu0 %v334
        %v336 = vpop.xlane.xlu0 %335
        %v337 = vsel %vm299, %v323, 0.0
        %338 = vadd.xlane.f32.xlu0 %v337
        %v339 = vpop.xlane.xlu0 %338
        %v340 = vadd.f32 %v332, %v336
        %v341 = vadd.f32 %v333, %v339
        %vm342 = vcmask 7168
        %343 = vst.msk [vmem:[#allocation3] sm:$0xff] %vm342, %v340
        %344 = vst.msk [vmem:[#allocation3 + $0x8] sm:$0xff] %vm342, %v341
        %345 = vst.msk [vmem:[#allocation2] sm:$0xff] %vm342, %v306
        %346 = vst.msk [vmem:[#allocation2 + $0x8] sm:$0xff] %vm342, %v307
        %p347 = scmp.eq.s32.totalorder %s26, %s25
        // Predicated region
        $region41: #{tpu_custom_call.1} parent=27 // pred_check
          %p348 = pneg %p347
        $region42: #{tpu_custom_call.1} parent=27 // pred_check_branch
          %350 = sbr.rel (%p348) target = $region44
        $region43: #{tpu_custom_call.1} parent=27 // pred_region
          %v351 = vunpack.c.l.bf16 %v232
          %v352 = vunpack.c.l.bf16 %v233
          %v353 = vunpack.c.l.bf16 %v234
          %v354 = vunpack.c.l.bf16 %v235
          %v355 = vmul.f32 %v351, %v353
          %v356 = vmul.f32 %v352, %v354
          %v357 = vsel %vm246, %v355, 0.0
          %358 = vadd.xlane.f32.xlu0 %v357
          %v359 = vpop.xlane.xlu0 %358
          %v360 = vsel %vm246, %v356, 0.0
          %361 = vadd.xlane.f32.xlu0 %v360
          %v362 = vpop.xlane.xlu0 %361
          %v363 = vmul.f32 %v294, %v359
          %v364 = vmul.f32 %v294, %v362
          %365 = vst.msk [vmem:[#allocation4] sm:$0xff] %vm342, %v363
          %366 = vst.msk [vmem:[#allocation4 + $0x8] sm:$0xff] %vm342, %v364
        $region44: #{tpu_custom_call.1} parent=27 // pred_fallthru
          _
        %p367 = scmp.eq.s32.totalorder %s26, 1
        // Predicated region
        $region45: #{tpu_custom_call.1} parent=27 // pred_check
          %p368 = pneg %p367
        $region46: #{tpu_custom_call.1} parent=27 // pred_check_branch
          %370 = sbr.rel (%p368) target = $region48
        $region47: #{tpu_custom_call.1} parent=27 // pred_region
          %v371 = vld [vmem:[#allocation2] sm:$0xff]
          %v372 = vld [vmem:[#allocation2 + $0x8] sm:$0xff]
          %v373 = vld [vmem:[#allocation3] sm:$0xff]
          %v374 = vld [vmem:[#allocation3 + $0x8] sm:$0xff]
          %v375 = vlog2.pop %v373
          %v376 = vmul.f32 %v375, 0.6931472
          %v377 = vlog2.pop %v374
          %v378 = vmul.f32 %v377, 0.6931472
          %v379 = vadd.f32 %v371, %v376
          %v380 = vadd.f32 %v372, %v378
          %v381 = vld [vmem:[#allocation4] sm:$0xff]
          %v382 = vld [vmem:[#allocation4 + $0x8] sm:$0xff]
          %v383 = vsub.f32 %v379, %v381
          %v384 = vsub.f32 %v380, %v382
          %385 = vst.msk [vmem:[%s219] sm:$0xff] %vm342, %v383
          %386 = vst.msk [vmem:[%s219 + $0x8] sm:$0xff] %vm342, %v384
        $region48: #{tpu_custom_call.1} parent=27 // pred_fallthru
          _
        %s387 = smul.u32 2, %s25
        %p388 = scmp.lt.s32.totalorder %s387, 3
        %s389 = scalar_select %p388, %s387, 3
        %s390 = smul.addr %s389, 8
        %s391 = scalar_lea.vmem %s3, %s390
        // Predicated region
        $region49: #{tpu_custom_call.1} parent=27 // pred_check
          %p392 = pneg %p103
        $region50: #{tpu_custom_call.1} parent=27 // pred_check_branch
          %394 = sbr.rel (%p392) target = $region52
        $region51: #{tpu_custom_call.1} parent=27 // pred_region
          %s395 = smul.u32 2, %s25
        $region52: #{tpu_custom_call.1} parent=27 // pred_fallthru
          _
      $region28: #{tpu_custom_call.1} parent=5 // pred_fallthru
        _
      %p396 = scmp.le.s32.totalorder 2, %s16
      // Predicated region
      $region53: #{tpu_custom_call.1} parent=5 // pred_check
        %p397 = pneg %p396
      $region54: #{tpu_custom_call.1} parent=5 // pred_check_branch
        %399 = sbr.rel (%p397) target = $region56
      $region55: #{tpu_custom_call.1} parent=5 // pred_region
        %s400 = ssub.s32 %s16, 2
        // Predicated region
        $region57: #{tpu_custom_call.1} parent=55 // pred_check
          %p401 = pneg %p109
        $region58: #{tpu_custom_call.1} parent=55 // pred_check_branch
          %403 = sbr.rel (%p401) target = $region60
        $region59: #{tpu_custom_call.1} parent=55 // pred_region
          %s404 = smul.u32 2, %s27
          %p405 = scmp.lt.s32.totalorder %s404, 3
          %s406 = scalar_select %p405, %s404, 3
          %s407 = smul.addr %s406, 8
          %s408 = scalar_lea.vmem %s3, %s407
        $region60: #{tpu_custom_call.1} parent=55 // pred_fallthru
          _
      $region56: #{tpu_custom_call.1} parent=5 // pred_fallthru
        _
    $region6: #{tpu_custom_call.1} parent=1 // loop_footer
      %s20 = sadd.s32 1, %s16
    $region7: #{tpu_custom_call.1} parent=1 // loop_footer_branch
      %15 = sbr.rel target = $region3
    $region8: #{tpu_custom_call.1} parent=1 // loop_exit
      _
    %409 = vsyncpa [#allocation8], 1
    %s410 = scalar_lea.sflag [#allocation8], 1
    %411 = vsyncpa %s410, 1
    %412 = vsyncpa [#allocation10], 1
    %s413 = scalar_lea.sflag [#allocation10], 1
    %414 = vsyncpa %s413, 1

</llo_original>
